<compile_context>
chip_gen: v7x
topology: tpu7x:2x2x1
jax: 0.10.0
libtpu: 0.0.40
codegen_flags: <defaults>
</compile_context>

<pallas_src>
import functools

import jax
import jax.numpy as jnp
from jax.experimental import pallas as pl
from jax.experimental.pallas import tpu as pltpu


def _round_up(x, m):
    return ((x + m - 1) // m) * m


def _mlp_kernel(xi_ref, xj_ref, w1_ref, b1_ref, w2_ref, b2_ref,
                w3_ref, b3_ref, out_ref, *, cout):
    # elementwise product of the two node embeddings (VPU, input dtype)
    x = xi_ref[...] * xj_ref[...]
    cdt = w1_ref.dtype  # matmul-input dtype: bf16 by default, f32 if disabled

    # hidden layer 1: Linear + ReLU   (dropout: eval mode -> identity)
    h = jnp.dot(x.astype(cdt), w1_ref[...],
                preferred_element_type=jnp.float32) + b1_ref[...]
    h = jnp.maximum(h, 0.0)

    # hidden layer 2: Linear + ReLU
    h = jnp.dot(h.astype(cdt), w2_ref[...],
                preferred_element_type=jnp.float32) + b2_ref[...]
    h = jnp.maximum(h, 0.0)

    # output layer
    if cout == 1:
        # Cout == 1: VPU broadcast-multiply by the (1, H) w3 row + lane
        # reduction into a (bm, 1) column.  Avoids a degenerate N=1 MXU
        # matmul / any relayout of h; the narrow masked store is ~bm*4 B
        # per block and negligible.
        z = jnp.sum(h * w3_ref[...], axis=-1, keepdims=True) + b3_ref[...]
    else:
        z = jnp.dot(h.astype(cdt), w3_ref[...],
                    preferred_element_type=jnp.float32) + b3_ref[...]
    out_ref[...] = jax.nn.sigmoid(z).astype(out_ref.dtype)


@functools.partial(jax.jit, static_argnames=("block_m", "use_bf16"))
def link_predictor(x_i, x_j, w1, b1, w2, b2, w3, b3, *,
                   block_m=512, use_bf16=True):
    """Pallas LinkPredictor forward.

    x_i, x_j : [B, in_channels]        (f32 or bf16; used as given)
    w1       : [in_channels, hidden]   b1: [1, hidden] (or [hidden])
    w2       : [hidden, hidden]        b2: [1, hidden]
    w3       : [hidden, out_channels]  b3: [1, out_channels]
    returns  : [B, out_channels]       float32
    """
    B, Cin = x_i.shape
    H = w1.shape[1]
    Cout = w3.shape[1]

    in_itemsize = x_i.dtype.itemsize
    wdt = jnp.bfloat16 if use_bf16 else jnp.float32
    w_itemsize = jnp.dtype(wdt).itemsize

    # ---- batch tile selection (no wrapper-side padding) --------------------
    bm_cap = max(128, _round_up(block_m, 128))
    if B <= 128:
        bm = _round_up(max(B, 8), 8)                     # one small block
    elif B <= 2 * bm_cap:
        # at least 2 grid steps so both v7x TensorCores get work
        bm = max(128, _round_up(pl.cdiv(B, 2), 128))
    else:
        bm = bm_cap

    def vmem_need(bm_):
        return (2 * 2 * bm_ * Cin * in_itemsize          # x_i, x_j double-buffered
                + 2 * bm_ * Cout * 4                     # output double-buffered
                + (Cin * H + H * H) * w_itemsize         # resident w1, w2
                + H * Cout * (4 if Cout == 1 else w_itemsize)
                + (2 * H + Cout) * 4                     # biases
                + 2 * bm_ * H * 4)                       # live h intermediates

    # Shrink the tile if the footprint would blow a conservative VMEM budget
    # (v5e: 16 MiB scoped default; v7x: 64 MiB physical VMEM per TC).
    while bm > 128 and vmem_need(bm) > 40 * (1 << 20):
        bm = max(128, _round_up(bm // 2, 128))
    grid_m = pl.cdiv(B, bm)
    vmem_limit = int(min(60 * (1 << 20),
                         max(2 * vmem_need(bm), 8 * (1 << 20))))

    # ---- operands -----------------------------------------------------------
    w1c = w1.astype(wdt)
    w2c = w2.astype(wdt)
    b1r = b1.reshape(1, H).astype(jnp.float32)
    b2r = b2.reshape(1, H).astype(jnp.float32)
    if Cout == 1:
        w3c = w3.reshape(1, H).astype(jnp.float32)       # broadcast row, VPU path
        b3r = b3.reshape(1, 1).astype(jnp.float32)
    else:
        w3c = w3.astype(wdt)
        b3r = b3.reshape(1, Cout).astype(jnp.float32)

    x_spec = pl.BlockSpec((bm, Cin), lambda i: (i, 0))
    out_spec = pl.BlockSpec((bm, Cout), lambda i: (i, 0))
    # Weights / biases: whole-array, VMEM-resident (fetched once, not
    # pipelined per grid step).
    vmem_full = pl.BlockSpec(memory_space=pltpu.MemorySpace.VMEM)

    flops = 2 * B * (Cin * H + H * H + H * Cout) + B * Cin
    bytes_accessed = (2 * B * Cin) * in_itemsize + B * Cout * 4 + sum(
        int(a.size) * a.dtype.itemsize
        for a in (w1c, w2c, w3c, b1r, b2r, b3r))

    out = pl.pallas_call(
        functools.partial(_mlp_kernel, cout=Cout),
        out_shape=jax.ShapeDtypeStruct((B, Cout), jnp.float32),
        grid_spec=pltpu.PrefetchScalarGridSpec(
            num_scalar_prefetch=0,
            grid=(grid_m,),
            in_specs=[
                x_spec, x_spec,
                vmem_full, vmem_full,   # w1, b1
                vmem_full, vmem_full,   # w2, b2
                vmem_full, vmem_full,   # w3, b3
            ],
            out_specs=out_spec,
        ),
        compiler_params=pltpu.CompilerParams(
            dimension_semantics=("parallel",),
            vmem_limit_bytes=vmem_limit),
        cost_estimate=pl.CostEstimate(
            flops=int(flops),
            transcendentals=int(2 * B * Cout),   # sigmoid ~ exp + reciprocal
            bytes_accessed=int(bytes_accessed)),
    )(x_i, x_j, w1c, b1r, w2c, b2r, w3c, b3r)
    return out


def _init_linear(key, fan_in, fan_out):
    """Deterministic PyTorch-Linear-style init: U(-1/sqrt(fan_in), 1/sqrt(fan_in))."""
    kw, kb = jax.random.split(key)
    bound = 1.0 / jnp.sqrt(jnp.float32(fan_in))
    w = jax.random.uniform(kw, (fan_in, fan_out), jnp.float32, -bound, bound)
    b = jax.random.uniform(kb, (1, fan_out), jnp.float32, -bound, bound)
    return w, b


def _reference(x_i, x_j, w1, b1, w2, b2, w3, b3):
    x = x_i * x_j
    x = jnp.maximum(x @ w1 + b1, 0.0)
    x = jnp.maximum(x @ w2 + b2, 0.0)
    return jax.nn.sigmoid(x @ w3 + b3)


if __name__ == "__main__":
    # Small config consistent with the module: num_layers=3,
    # in_channels=32, hidden_channels=32, out_channels=1, dropout=0.5 (eval).
    B, Cin, H, Cout = 64, 32, 32, 1

    key = jax.random.PRNGKey(0)
    k_xi, k_xj, k1, k2, k3 = jax.random.split(key, 5)

    x_i = jax.random.normal(k_xi, (B, Cin), jnp.float32)
    x_j = jax.random.normal(k_xj, (B, Cin), jnp.float32)

    w1, b1 = _init_linear(k1, Cin, H)
    w2, b2 = _init_linear(k2, H, H)
    w3, b3 = _init_linear(k3, H, Cout)

    ref = _reference(x_i, x_j, w1, b1, w2, b2, w3, b3)

    # f32 path: tight check against the pure-JAX reference (single block).
    out_f32 = jax.block_until_ready(
        link_predictor(x_i, x_j, w1, b1, w2, b2, w3, b3, use_bf16=False))
    assert out_f32.shape == (B, Cout)
    assert jnp.allclose(out_f32, ref, atol=1e-5, rtol=1e-5), "f32 mismatch"

    # default path: bf16 matmul inputs, f32 accumulation.
    out = jax.block_until_ready(
        link_predictor(x_i, x_j, w1, b1, w2, b2, w3, b3))
    assert out.shape == (B, Cout)
    assert jnp.allclose(out, ref, atol=2e-2), "bf16 mismatch"

    # ragged multi-block path: grid > 1 with a partial (masked) edge block,
    # no wrapper-side padding.  f32 tight check guards the edge-block logic.
    B2 = 200
    k_a, k_b = jax.random.split(jax.random.PRNGKey(1))
    xa = jax.random.normal(k_a, (B2, Cin), jnp.float32)
    xb = jax.random.normal(k_b, (B2, Cin), jnp.float32)
    ref2 = _reference(xa, xb, w1, b1, w2, b2, w3, b3)
    out2 = jax.block_until_ready(
        link_predictor(xa, xb, w1, b1, w2, b2, w3, b3, use_bf16=False))
    assert out2.shape == (B2, Cout)
    assert jnp.allclose(out2, ref2, atol=1e-5, rtol=1e-5), "ragged f32 mismatch"

    # wider-output path (exercises the MXU final-layer branch, Cout > 1).
    Cout3 = 8
    w3w, b3w = _init_linear(jax.random.PRNGKey(2), H, Cout3)
    ref3 = _reference(x_i, x_j, w1, b1, w2, b2, w3w, b3w)
    out3 = jax.block_until_ready(
        link_predictor(x_i, x_j, w1, b1, w2, b2, w3w, b3w, use_bf16=False))
    assert out3.shape == (B, Cout3)
    assert jnp.allclose(out3, ref3, atol=1e-5, rtol=1e-5), "wide-Cout mismatch"

    print("KERNEL_OK")
</pallas_src>

<mosaic_0001>
module attributes {stable_mosaic.version = 11 : i64} {
  func.func @_mlp_kernel(%arg0: i32, %arg1: memref<64x32xf32, #tpu.memory_space<vmem>>, %arg2: memref<64x32xf32, #tpu.memory_space<vmem>>, %arg3: memref<32x32xf32, #tpu.memory_space<vmem>>, %arg4: memref<1x32xf32, #tpu.memory_space<vmem>>, %arg5: memref<32x32xf32, #tpu.memory_space<vmem>>, %arg6: memref<1x32xf32, #tpu.memory_space<vmem>>, %arg7: memref<1x32xf32, #tpu.memory_space<vmem>>, %arg8: memref<1x1xf32, #tpu.memory_space<vmem>>, %arg9: memref<64x1xf32, #tpu.memory_space<vmem>>) attributes {dimension_semantics = [#tpu.dimension_semantics<parallel>], iteration_bounds = array<i64: 1>, scalar_prefetch = 0 : i64, scratch_operands = 0 : i64, tpu.core_type = #tpu.core_type<tc>, window_params = [{transform_indices = @transform_0, window_bounds = array<i64: 64, 32>}, {transform_indices = @transform_1, window_bounds = array<i64: 64, 32>}, {pipeline_mode = #tpu.pipeline_mode<synchronous>, transform_indices = @transform_2, window_bounds = array<i64: 32, 32>}, {pipeline_mode = #tpu.pipeline_mode<synchronous>, transform_indices = @transform_3, window_bounds = array<i64: 1, 32>}, {pipeline_mode = #tpu.pipeline_mode<synchronous>, transform_indices = @transform_4, window_bounds = array<i64: 32, 32>}, {pipeline_mode = #tpu.pipeline_mode<synchronous>, transform_indices = @transform_5, window_bounds = array<i64: 1, 32>}, {pipeline_mode = #tpu.pipeline_mode<synchronous>, transform_indices = @transform_6, window_bounds = array<i64: 1, 32>}, {pipeline_mode = #tpu.pipeline_mode<synchronous>, transform_indices = @transform_7, window_bounds = array<i64: 1, 1>}, {transform_indices = @transform_8, window_bounds = array<i64: 64, 1>}]} {
    %c0 = arith.constant 0 : index
    %c0_0 = arith.constant 0 : index
    %0 = vector.load %arg1[%c0, %c0_0] : memref<64x32xf32, #tpu.memory_space<vmem>>, vector<64x32xf32>
    %c0_1 = arith.constant 0 : index
    %c0_2 = arith.constant 0 : index
    %1 = vector.load %arg2[%c0_1, %c0_2] : memref<64x32xf32, #tpu.memory_space<vmem>>, vector<64x32xf32>
    %2 = arith.mulf %0, %1 : vector<64x32xf32>
    %c0_3 = arith.constant 0 : index
    %c0_4 = arith.constant 0 : index
    %3 = vector.load %arg3[%c0_3, %c0_4] : memref<32x32xf32, #tpu.memory_space<vmem>>, vector<32x32xf32>
    %cst = arith.constant dense<0.000000e+00> : vector<64x32xf32>
    %4 = tpu.matmul %2, %3, %cst {dimension_numbers = #tpu.dot_dimension_numbers<[1], [0], [0], [1], [0, 0, 1, 1], [], []>} : vector<64x32xf32>, vector<32x32xf32>, vector<64x32xf32> -> vector<64x32xf32>
    %c0_5 = arith.constant 0 : index
    %c0_6 = arith.constant 0 : index
    %5 = vector.load %arg4[%c0_5, %c0_6] : memref<1x32xf32, #tpu.memory_space<vmem>>, vector<1x32xf32>
    %6 = vector.broadcast %5 : vector<1x32xf32> to vector<64x32xf32>
    %7 = arith.addf %4, %6 : vector<64x32xf32>
    %cst_7 = arith.constant 0.000000e+00 : f32
    %8 = vector.broadcast %cst_7 : f32 to vector<64x32xf32>
    %9 = arith.maximumf %7, %8 : vector<64x32xf32>
    %c0_8 = arith.constant 0 : index
    %c0_9 = arith.constant 0 : index
    %10 = vector.load %arg5[%c0_8, %c0_9] : memref<32x32xf32, #tpu.memory_space<vmem>>, vector<32x32xf32>
    %cst_10 = arith.constant dense<0.000000e+00> : vector<64x32xf32>
    %11 = tpu.matmul %9, %10, %cst_10 {dimension_numbers = #tpu.dot_dimension_numbers<[1], [0], [0], [1], [0, 0, 1, 1], [], []>} : vector<64x32xf32>, vector<32x32xf32>, vector<64x32xf32> -> vector<64x32xf32>
    %c0_11 = arith.constant 0 : index
    %c0_12 = arith.constant 0 : index
    %12 = vector.load %arg6[%c0_11, %c0_12] : memref<1x32xf32, #tpu.memory_space<vmem>>, vector<1x32xf32>
    %13 = vector.broadcast %12 : vector<1x32xf32> to vector<64x32xf32>
    %14 = arith.addf %11, %13 : vector<64x32xf32>
    %cst_13 = arith.constant 0.000000e+00 : f32
    %15 = vector.broadcast %cst_13 : f32 to vector<64x32xf32>
    %16 = arith.maximumf %14, %15 : vector<64x32xf32>
    %c0_14 = arith.constant 0 : index
    %c0_15 = arith.constant 0 : index
    %17 = vector.load %arg7[%c0_14, %c0_15] : memref<1x32xf32, #tpu.memory_space<vmem>>, vector<1x32xf32>
    %18 = vector.broadcast %17 : vector<1x32xf32> to vector<64x32xf32>
    %19 = arith.mulf %16, %18 : vector<64x32xf32>
    %cst_16 = arith.constant dense<0.000000e+00> : vector<64xf32>
    %20 = vector.multi_reduction <add>, %19, %cst_16 [1] : vector<64x32xf32> to vector<64xf32>
    %21 = vector.shape_cast %20 : vector<64xf32> to vector<64x1xf32>
    %c0_17 = arith.constant 0 : index
    %c0_18 = arith.constant 0 : index
    %22 = vector.load %arg8[%c0_17, %c0_18] : memref<1x1xf32, #tpu.memory_space<vmem>>, vector<1x1xf32>
    %23 = vector.broadcast %22 : vector<1x1xf32> to vector<64x1xf32>
    %24 = arith.addf %21, %23 : vector<64x1xf32>
    %25 = arith.negf %24 : vector<64x1xf32>
    %26 = math.exp %25 : vector<64x1xf32>
    %cst_19 = arith.constant 1.000000e+00 : f32
    %27 = vector.broadcast %cst_19 : f32 to vector<64x1xf32>
    %28 = arith.addf %27, %26 : vector<64x1xf32>
    %29 = arith.divf %27, %28 : vector<64x1xf32>
    %c0_20 = arith.constant 0 : index
    %c0_21 = arith.constant 0 : index
    %30 = vector.load %arg9[%c0_20, %c0_21] : memref<64x1xf32, #tpu.memory_space<vmem>>, vector<64x1xf32>
    tpu.vector_store %arg9[%c0_20, %c0_21], %29 {strides = array<i32>} : memref<64x1xf32, #tpu.memory_space<vmem>>, vector<64x1xf32>,
    return
  }
  func.func @transform_0(%arg0: i32) -> (i32, i32) {
    %c0_i32 = arith.constant 0 : i32
    %c0_i32_0 = arith.constant 0 : i32
    return %arg0, %c0_i32 : i32, i32
  }
  func.func @transform_1(%arg0: i32) -> (i32, i32) {
    %c0_i32 = arith.constant 0 : i32
    %c0_i32_0 = arith.constant 0 : i32
    return %arg0, %c0_i32 : i32, i32
  }
  func.func @transform_2(%arg0: i32) -> (i32, i32) {
    %c0_i32 = arith.constant 0 : i32
    %c0_i32_0 = arith.constant 0 : i32
    %c0_i32_1 = arith.constant 0 : i32
    return %c0_i32, %c0_i32_0 : i32, i32
  }
  func.func @transform_3(%arg0: i32) -> (i32, i32) {
    %c0_i32 = arith.constant 0 : i32
    %c0_i32_0 = arith.constant 0 : i32
    %c0_i32_1 = arith.constant 0 : i32
    return %c0_i32, %c0_i32_0 : i32, i32
  }
  func.func @transform_4(%arg0: i32) -> (i32, i32) {
    %c0_i32 = arith.constant 0 : i32
    %c0_i32_0 = arith.constant 0 : i32
    %c0_i32_1 = arith.constant 0 : i32
    return %c0_i32, %c0_i32_0 : i32, i32
  }
  func.func @transform_5(%arg0: i32) -> (i32, i32) {
    %c0_i32 = arith.constant 0 : i32
    %c0_i32_0 = arith.constant 0 : i32
    %c0_i32_1 = arith.constant 0 : i32
    return %c0_i32, %c0_i32_0 : i32, i32
  }
  func.func @transform_6(%arg0: i32) -> (i32, i32) {
    %c0_i32 = arith.constant 0 : i32
    %c0_i32_0 = arith.constant 0 : i32
    %c0_i32_1 = arith.constant 0 : i32
    return %c0_i32, %c0_i32_0 : i32, i32
  }
  func.func @transform_7(%arg0: i32) -> (i32, i32) {
    %c0_i32 = arith.constant 0 : i32
    %c0_i32_0 = arith.constant 0 : i32
    %c0_i32_1 = arith.constant 0 : i32
    return %c0_i32, %c0_i32_0 : i32, i32
  }
  func.func @transform_8(%arg0: i32) -> (i32, i32) {
    %c0_i32 = arith.constant 0 : i32
    %c0_i32_0 = arith.constant 0 : i32
    return %arg0, %c0_i32 : i32, i32
  }
}

</mosaic_0001>

<llo_original>
// kernel: link_predictor.1
$region0: #{link_predictor.1}
  #allocation0 [shape = 'u32[]', space=smem, size = 0x4, offset = 0x4, fixed_abs, tag = 'smem constant byte address 0x4 - core index']
  #allocation1 [shape = 'u32[144,128]{1,0:T(1,128)}', space=vmem, size = 0x12000, scoped, tag = 'internal scratch']
  #allocation2 [shape = 'f32[1,1]{1,0:T(1,128)S(1)}', space=vmem, size = 0x200, scoped, tag = 'scoped memory for link_predictor.1']
  %s0 = inlined_call_operand.vmem [shape: f32[64,32], index: 0, kind: input, shape index: {}]
  %s1 = inlined_call_operand.vmem [shape: f32[64,32], index: 1, kind: input, shape index: {}]
  %s2 = inlined_call_operand.vmem [shape: f32[32,32], index: 2, kind: input, shape index: {}]
  %s3 = inlined_call_operand.vmem [shape: f32[1,32], index: 3, kind: input, shape index: {}]
  %s4 = inlined_call_operand.vmem [shape: f32[32,32], index: 4, kind: input, shape index: {}]
  %s5 = inlined_call_operand.vmem [shape: f32[1,32], index: 5, kind: input, shape index: {}]
  %s6 = inlined_call_operand.vmem [shape: f32[1,32], index: 6, kind: input, shape index: {}]
  %s7 = inlined_call_operand.<no memory space> [shape: f32[1,1], index: 7, kind: input, shape index: {}]
  %s8 = inlined_call_operand.vmem [shape: f32[64,1], index: 8, kind: output, shape index: {}]
  %s9 = sld [smem:[#allocation0]]
  $region42: #{link_predictor.1} parent=0
    _
  %s11 = ssub.s32 1, %s9
  %s12 = scalar_select 0, %s11, %s9
  %v13 = vstv %s7
  %14 = vst [vmem:[#allocation2] sm:$0x1] %v13
  // Predicated region
  $region2: #{link_predictor.1} parent=0 // pred_check
    _
  $region3: #{link_predictor.1} parent=0 // pred_check_branch
    %16 = sbr.rel (0) target = $region5
  $region4: #{link_predictor.1} parent=0 // pred_region
    _
  $region5: #{link_predictor.1} parent=0 // pred_fallthru
    _
  // Predicated region
  $region6: #{link_predictor.1} parent=0 // pred_check
    _
  $region7: #{link_predictor.1} parent=0 // pred_check_branch
    %18 = sbr.rel (0) target = $region9
  $region8: #{link_predictor.1} parent=0 // pred_region
    _
  $region9: #{link_predictor.1} parent=0 // pred_fallthru
    _
  // Predicated region
  $region10: #{link_predictor.1} parent=0 // pred_check
    _
  $region11: #{link_predictor.1} parent=0 // pred_check_branch
    %20 = sbr.rel (0) target = $region13
  $region12: #{link_predictor.1} parent=0 // pred_region
    _
  $region13: #{link_predictor.1} parent=0 // pred_fallthru
    _
  // Predicated region
  $region14: #{link_predictor.1} parent=0 // pred_check
    _
  $region15: #{link_predictor.1} parent=0 // pred_check_branch
    %22 = sbr.rel (0) target = $region17
  $region16: #{link_predictor.1} parent=0 // pred_region
    _
  $region17: #{link_predictor.1} parent=0 // pred_fallthru
    _
  // Predicated region
  $region18: #{link_predictor.1} parent=0 // pred_check
    _
  $region19: #{link_predictor.1} parent=0 // pred_check_branch
    %24 = sbr.rel (0) target = $region21
  $region20: #{link_predictor.1} parent=0 // pred_region
    _
  $region21: #{link_predictor.1} parent=0 // pred_fallthru
    _
  // Predicated region
  $region22: #{link_predictor.1} parent=0 // pred_check
    _
  $region23: #{link_predictor.1} parent=0 // pred_check_branch
    %26 = sbr.rel (0) target = $region25
  $region24: #{link_predictor.1} parent=0 // pred_region
    _
  $region25: #{link_predictor.1} parent=0 // pred_fallthru
    _
  // Predicated region
  $region26: #{link_predictor.1} parent=0 // pred_check
    _
  $region27: #{link_predictor.1} parent=0 // pred_check_branch
    %28 = sbr.rel (0) target = $region29
  $region28: #{link_predictor.1} parent=0 // pred_region
    _
  $region29: #{link_predictor.1} parent=0 // pred_fallthru
    _
  // Predicated region
  $region30: #{link_predictor.1} parent=0 // pred_check
    _
  $region31: #{link_predictor.1} parent=0 // pred_check_branch
    %30 = sbr.rel (0) target = $region33
  $region32: #{link_predictor.1} parent=0 // pred_region
    _
  $region33: #{link_predictor.1} parent=0 // pred_fallthru
    _
  %v31 = vld [vmem:[%s0] sm:$0xff]
  %v32 = vld [vmem:[%s0 + $0x8] sm:$0xff]
  %v33 = vld [vmem:[%s0 + $0x10] sm:$0xff]
  %v34 = vld [vmem:[%s0 + $0x18] sm:$0xff]
  %v35 = vld [vmem:[%s0 + $0x20] sm:$0xff]
  %v36 = vld [vmem:[%s0 + $0x28] sm:$0xff]
  %v37 = vld [vmem:[%s0 + $0x30] sm:$0xff]
  %v38 = vld [vmem:[%s0 + $0x38] sm:$0xff]
  %v39 = vld [vmem:[%s1] sm:$0xff]
  %v40 = vld [vmem:[%s1 + $0x8] sm:$0xff]
  %v41 = vld [vmem:[%s1 + $0x10] sm:$0xff]
  %v42 = vld [vmem:[%s1 + $0x18] sm:$0xff]
  %v43 = vld [vmem:[%s1 + $0x20] sm:$0xff]
  %v44 = vld [vmem:[%s1 + $0x28] sm:$0xff]
  %v45 = vld [vmem:[%s1 + $0x30] sm:$0xff]
  %v46 = vld [vmem:[%s1 + $0x38] sm:$0xff]
  %v47 = vmul.f32 %v31, %v39
  %v48 = vmul.f32 %v32, %v40
  %v49 = vmul.f32 %v33, %v41
  %v50 = vmul.f32 %v34, %v42
  %v51 = vmul.f32 %v35, %v43
  %v52 = vmul.f32 %v36, %v44
  %v53 = vmul.f32 %v37, %v45
  %v54 = vmul.f32 %v38, %v46
  %v55 = vld [vmem:[%s2] sm:$0xff]
  %v56 = vld [vmem:[%s2 + $0x8] sm:$0xff]
  %v57 = vld [vmem:[%s2 + $0x10] sm:$0xff]
  %v58 = vld [vmem:[%s2 + $0x18] sm:$0xff]
  %v59 = vld [vmem:[%s3] sm:$0x1]
  %v61 = vlaneseq
  %v62 = vshrl.u32 %v61, 7
  %v63 = vsub.s32 0, %v62
  %v64 = vrot.slane %v59, %v63
  %vm66 = vcmask 261120
  %v68 = vsel %vm66, %v47, 0
  %v71 = vsel %vm66, %v48, 0
  %v74 = vsel %vm66, %v49, 0
  %v77 = vsel %vm66, %v50, 0
  %v80 = vsel %vm66, %v51, 0
  %v83 = vsel %vm66, %v52, 0
  %v86 = vsel %vm66, %v53, 0
  %v89 = vsel %vm66, %v54, 0
  %91 = vmatprep.subr.mxu0 0.0
  %92 = vmatpush1.msra.mxu0 %v55
  %93 = vmatprep.subr.mxu0 0.0
  %94 = vmatpush1.msra.mxu0 %v56
  %95 = vmatprep.subr.mxu0 0.0
  %96 = vmatpush1.msra.mxu0 %v57
  %97 = vmatprep.subr.mxu0 0.0
  %98 = vmatpush1.msra.mxu0 %v58
  %99 = vmatprep.subr.mxu0 0.0
  %100 = vmatpush1.msra.mxu0 0.0
  %101 = vmatprep.subr.mxu0 0.0
  %102 = vmatpush1.msra.mxu0 0.0
  %103 = vmatprep.subr.mxu0 0.0
  %104 = vmatpush1.msra.mxu0 0.0
  %105 = vmatprep.subr.mxu0 0.0
  %106 = vmatpush1.msra.mxu0 0.0
  %107 = vmatprep.subr.mxu0 0.0
  %108 = vmatpush1.msra.mxu0 0.0
  %109 = vmatprep.subr.mxu0 0.0
  %110 = vmatpush1.msra.mxu0 0.0
  %111 = vmatprep.subr.mxu0 0.0
  %112 = vmatpush1.msra.mxu0 0.0
  %113 = vmatprep.subr.mxu0 0.0
  %114 = vmatpush1.msra.mxu0 0.0
  %115 = vmatprep.subr.mxu0 0.0
  %116 = vmatpush1.msra.mxu0 0.0
  %117 = vmatprep.subr.mxu0 0.0
  %118 = vmatpush1.msra.mxu0 0.0
  %119 = vmatprep.subr.mxu0 0.0
  %120 = vmatpush1.msra.mxu0 0.0
  %121 = vmatprep.subr.mxu0 0.0
  %122 = vmatpush1.msra.mxu0 0.0
  %123 = vmatprep.subr.mxu0 0.0
  %124 = vmatpush1.msra.mxu0 0.0
  %125 = vmatprep.subr.mxu0 0.0
  %126 = vmatpush1.msra.mxu0 0.0
  %127 = vmatprep.subr.mxu0 0.0
  %128 = vmatpush1.msra.mxu0 0.0
  %129 = vmatprep.subr.mxu0 0.0
  %130 = vmatpush1.msra.mxu0 0.0
  %131 = vmatprep.subr.mxu0 0.0
  %132 = vmatpush1.msra.mxu0 0.0
  %133 = vmatprep.subr.mxu0 0.0
  %134 = vmatpush1.msra.mxu0 0.0
  %135 = vmatprep.subr.mxu0 0.0
  %136 = vmatpush1.msra.mxu0 0.0
  %137 = vmatprep.subr.mxu0 0.0
  %138 = vmatpush1.msra.mxu0 0.0
  %139 = vmatprep.subr.mxu0 0.0
  %140 = vmatpush1.msra.mxu0 0.0
  %141 = vmatprep.subr.mxu0 0.0
  %142 = vmatpush1.msra.mxu0 0.0
  %143 = vmatprep.subr.mxu0 0.0
  %144 = vmatpush1.msra.mxu0 0.0
  %145 = vmatprep.subr.mxu0 0.0
  %146 = vmatpush1.msra.mxu0 0.0
  %147 = vmatprep.subr.mxu0 0.0
  %148 = vmatpush1.msra.mxu0 0.0
  %149 = vmatprep.subr.mxu0 0.0
  %150 = vmatpush1.msra.mxu0 0.0
  %151 = vmatprep.subr.mxu0 0.0
  %152 = vmatpush1.msra.mxu0 0.0
  %153 = vmatprep.subr.mxu0 0.0
  %154 = vmatpush1.msra.mxu0 0.0
  %155 = vmatprep.mubr.f32.mxu0 0.0
  %156 = vmatmul.mubr.f32.gmra.mrb[0].mxu0 %v68
  %v157 = vpop.f32.mrb[0].mxu0
  %v158 = vadd.f32 %v64, %v157
  %v159 = vpop.f32.mrb[0].mxu0
  %160 = vmatprep.mubr.f32.mxu0 0.0
  %161 = vmatmul.mubr.f32.gmra.mrb[0].mxu0 %v71
  %v162 = vpop.f32.mrb[0].mxu0
  %v163 = vadd.f32 %v64, %v162
  %v164 = vpop.f32.mrb[0].mxu0
  %165 = vmatprep.mubr.f32.mxu0 0.0
  %166 = vmatmul.mubr.f32.gmra.mrb[0].mxu0 %v74
  %v167 = vpop.f32.mrb[0].mxu0
  %v168 = vadd.f32 %v64, %v167
  %v169 = vpop.f32.mrb[0].mxu0
  %170 = vmatprep.mubr.f32.mxu0 0.0
  %171 = vmatmul.mubr.f32.gmra.mrb[0].mxu0 %v77
  %v172 = vpop.f32.mrb[0].mxu0
  %v173 = vadd.f32 %v64, %v172
  %v174 = vpop.f32.mrb[0].mxu0
  %175 = vmatprep.mubr.f32.mxu0 0.0
  %176 = vmatmul.mubr.f32.gmra.mrb[0].mxu0 %v80
  %v177 = vpop.f32.mrb[0].mxu0
  %v178 = vadd.f32 %v64, %v177
  %v179 = vpop.f32.mrb[0].mxu0
  %180 = vmatprep.mubr.f32.mxu0 0.0
  %181 = vmatmul.mubr.f32.gmra.mrb[0].mxu0 %v83
  %v182 = vpop.f32.mrb[0].mxu0
  %v183 = vadd.f32 %v64, %v182
  %v184 = vpop.f32.mrb[0].mxu0
  %185 = vmatprep.mubr.f32.mxu0 0.0
  %186 = vmatmul.mubr.f32.gmra.mrb[0].mxu0 %v86
  %v187 = vpop.f32.mrb[0].mxu0
  %v188 = vadd.f32 %v64, %v187
  %v189 = vpop.f32.mrb[0].mxu0
  %190 = vmatprep.mubr.f32.mxu0 0.0
  %191 = vmatmul.mubr.f32.gmra.mrb[0].mxu0 %v89
  %v192 = vpop.f32.mrb[0].mxu0
  %v193 = vadd.f32 %v64, %v192
  %v194 = vpop.f32.mrb[0].mxu0
  %195 = vdwg.mxu0
  %v196 = vmax.f32 %v158, 0.0
  %v197 = vmax.f32 %v163, 0.0
  %v198 = vmax.f32 %v168, 0.0
  %v199 = vmax.f32 %v173, 0.0
  %v200 = vmax.f32 %v178, 0.0
  %v201 = vmax.f32 %v183, 0.0
  %v202 = vmax.f32 %v188, 0.0
  %v203 = vmax.f32 %v193, 0.0
  %v204 = vld [vmem:[%s4] sm:$0xff]
  %v205 = vld [vmem:[%s4 + $0x8] sm:$0xff]
  %v206 = vld [vmem:[%s4 + $0x10] sm:$0xff]
  %v207 = vld [vmem:[%s4 + $0x18] sm:$0xff]
  %v208 = vld [vmem:[%s5] sm:$0x1]
  %v210 = vlaneseq
  %v211 = vshrl.u32 %v210, 7
  %v212 = vsub.s32 0, %v211
  %v213 = vrot.slane %v208, %v212
  %v216 = vsel %vm66, %v196, 0
  %v219 = vsel %vm66, %v197, 0
  %v222 = vsel %vm66, %v198, 0
  %v225 = vsel %vm66, %v199, 0
  %v228 = vsel %vm66, %v200, 0
  %v231 = vsel %vm66, %v201, 0
  %v234 = vsel %vm66, %v202, 0
  %v237 = vsel %vm66, %v203, 0
  %239 = vmatprep.subr.mxu0 0.0
  %240 = vmatpush1.msra.mxu0 %v204
  %241 = vmatprep.subr.mxu0 0.0
  %242 = vmatpush1.msra.mxu0 %v205
  %243 = vmatprep.subr.mxu0 0.0
  %244 = vmatpush1.msra.mxu0 %v206
  %245 = vmatprep.subr.mxu0 0.0
  %246 = vmatpush1.msra.mxu0 %v207
  %247 = vmatprep.subr.mxu0 0.0
  %248 = vmatpush1.msra.mxu0 0.0
  %249 = vmatprep.subr.mxu0 0.0
  %250 = vmatpush1.msra.mxu0 0.0
  %251 = vmatprep.subr.mxu0 0.0
  %252 = vmatpush1.msra.mxu0 0.0
  %253 = vmatprep.subr.mxu0 0.0
  %254 = vmatpush1.msra.mxu0 0.0
  %255 = vmatprep.subr.mxu0 0.0
  %256 = vmatpush1.msra.mxu0 0.0
  %257 = vmatprep.subr.mxu0 0.0
  %258 = vmatpush1.msra.mxu0 0.0
  %259 = vmatprep.subr.mxu0 0.0
  %260 = vmatpush1.msra.mxu0 0.0
  %261 = vmatprep.subr.mxu0 0.0
  %262 = vmatpush1.msra.mxu0 0.0
  %263 = vmatprep.subr.mxu0 0.0
  %264 = vmatpush1.msra.mxu0 0.0
  %265 = vmatprep.subr.mxu0 0.0
  %266 = vmatpush1.msra.mxu0 0.0
  %267 = vmatprep.subr.mxu0 0.0
  %268 = vmatpush1.msra.mxu0 0.0
  %269 = vmatprep.subr.mxu0 0.0
  %270 = vmatpush1.msra.mxu0 0.0
  %271 = vmatprep.subr.mxu0 0.0
  %272 = vmatpush1.msra.mxu0 0.0
  %273 = vmatprep.subr.mxu0 0.0
  %274 = vmatpush1.msra.mxu0 0.0
  %275 = vmatprep.subr.mxu0 0.0
  %276 = vmatpush1.msra.mxu0 0.0
  %277 = vmatprep.subr.mxu0 0.0
  %278 = vmatpush1.msra.mxu0 0.0
  %279 = vmatprep.subr.mxu0 0.0
  %280 = vmatpush1.msra.mxu0 0.0
  %281 = vmatprep.subr.mxu0 0.0
  %282 = vmatpush1.msra.mxu0 0.0
  %283 = vmatprep.subr.mxu0 0.0
  %284 = vmatpush1.msra.mxu0 0.0
  %285 = vmatprep.subr.mxu0 0.0
  %286 = vmatpush1.msra.mxu0 0.0
  %287 = vmatprep.subr.mxu0 0.0
  %288 = vmatpush1.msra.mxu0 0.0
  %289 = vmatprep.subr.mxu0 0.0
  %290 = vmatpush1.msra.mxu0 0.0
  %291 = vmatprep.subr.mxu0 0.0
  %292 = vmatpush1.msra.mxu0 0.0
  %293 = vmatprep.subr.mxu0 0.0
  %294 = vmatpush1.msra.mxu0 0.0
  %295 = vmatprep.subr.mxu0 0.0
  %296 = vmatpush1.msra.mxu0 0.0
  %297 = vmatprep.subr.mxu0 0.0
  %298 = vmatpush1.msra.mxu0 0.0
  %299 = vmatprep.subr.mxu0 0.0
  %300 = vmatpush1.msra.mxu0 0.0
  %301 = vmatprep.subr.mxu0 0.0
  %302 = vmatpush1.msra.mxu0 0.0
  %303 = vmatprep.mubr.f32.mxu0 0.0
  %304 = vmatmul.mubr.f32.gmra.mrb[0].mxu0 %v216
  %v305 = vpop.f32.mrb[0].mxu0
  %v306 = vadd.f32 %v213, %v305
  %v307 = vpop.f32.mrb[0].mxu0
  %308 = vmatprep.mubr.f32.mxu0 0.0
  %309 = vmatmul.mubr.f32.gmra.mrb[0].mxu0 %v219
  %v310 = vpop.f32.mrb[0].mxu0
  %v311 = vadd.f32 %v213, %v310
  %v312 = vpop.f32.mrb[0].mxu0
  %313 = vmatprep.mubr.f32.mxu0 0.0
  %314 = vmatmul.mubr.f32.gmra.mrb[0].mxu0 %v222
  %v315 = vpop.f32.mrb[0].mxu0
  %v316 = vadd.f32 %v213, %v315
  %v317 = vpop.f32.mrb[0].mxu0
  %318 = vmatprep.mubr.f32.mxu0 0.0
  %319 = vmatmul.mubr.f32.gmra.mrb[0].mxu0 %v225
  %v320 = vpop.f32.mrb[0].mxu0
  %v321 = vadd.f32 %v213, %v320
  %v322 = vpop.f32.mrb[0].mxu0
  %323 = vmatprep.mubr.f32.mxu0 0.0
  %324 = vmatmul.mubr.f32.gmra.mrb[0].mxu0 %v228
  %v325 = vpop.f32.mrb[0].mxu0
  %v326 = vadd.f32 %v213, %v325
  %v327 = vpop.f32.mrb[0].mxu0
  %328 = vmatprep.mubr.f32.mxu0 0.0
  %329 = vmatmul.mubr.f32.gmra.mrb[0].mxu0 %v231
  %v330 = vpop.f32.mrb[0].mxu0
  %v331 = vadd.f32 %v213, %v330
  %v332 = vpop.f32.mrb[0].mxu0
  %333 = vmatprep.mubr.f32.mxu0 0.0
  %334 = vmatmul.mubr.f32.gmra.mrb[0].mxu0 %v234
  %v335 = vpop.f32.mrb[0].mxu0
  %v336 = vadd.f32 %v213, %v335
  %v337 = vpop.f32.mrb[0].mxu0
  %338 = vmatprep.mubr.f32.mxu0 0.0
  %339 = vmatmul.mubr.f32.gmra.mrb[0].mxu0 %v237
  %v340 = vpop.f32.mrb[0].mxu0
  %v341 = vadd.f32 %v213, %v340
  %v342 = vpop.f32.mrb[0].mxu0
  %343 = vdwg.mxu0
  %v344 = vmax.f32 %v306, 0.0
  %v345 = vmax.f32 %v311, 0.0
  %v346 = vmax.f32 %v316, 0.0
  %v347 = vmax.f32 %v321, 0.0
  %v348 = vmax.f32 %v326, 0.0
  %v349 = vmax.f32 %v331, 0.0
  %v350 = vmax.f32 %v336, 0.0
  %v351 = vmax.f32 %v341, 0.0
  %v352 = vld [vmem:[%s6] sm:$0x1]
  %v354 = vlaneseq
  %v355 = vshrl.u32 %v354, 7
  %v356 = vsub.s32 0, %v355
  %v357 = vrot.slane %v352, %v356
  %v359 = vmul.f32 %v344, %v357
  %v360 = vmul.f32 %v345, %v357
  %v361 = vmul.f32 %v346, %v357
  %v362 = vmul.f32 %v347, %v357
  %v363 = vmul.f32 %v348, %v357
  %v364 = vmul.f32 %v349, %v357
  %v365 = vmul.f32 %v350, %v357
  %v366 = vmul.f32 %v351, %v357
  %v367 = vsel %vm66, %v359, 0.0
  %368 = vadd.xlane.f32.xlu0 %v367
  %v369 = vpop.xlane.xlu0 %368
  %v370 = vsel %vm66, %v360, 0.0
  %371 = vadd.xlane.f32.xlu0 %v370
  %v372 = vpop.xlane.xlu0 %371
  %v373 = vsel %vm66, %v361, 0.0
  %374 = vadd.xlane.f32.xlu0 %v373
  %v375 = vpop.xlane.xlu0 %374
  %v376 = vsel %vm66, %v362, 0.0
  %377 = vadd.xlane.f32.xlu0 %v376
  %v378 = vpop.xlane.xlu0 %377
  %v379 = vsel %vm66, %v363, 0.0
  %380 = vadd.xlane.f32.xlu0 %v379
  %v381 = vpop.xlane.xlu0 %380
  %v382 = vsel %vm66, %v364, 0.0
  %383 = vadd.xlane.f32.xlu0 %v382
  %v384 = vpop.xlane.xlu0 %383
  %v385 = vsel %vm66, %v365, 0.0
  %386 = vadd.xlane.f32.xlu0 %v385
  %v387 = vpop.xlane.xlu0 %386
  %v388 = vsel %vm66, %v366, 0.0
  %389 = vadd.xlane.f32.xlu0 %v388
  %v390 = vpop.xlane.xlu0 %389
  %v391 = vld [vmem:[#allocation2] sm:$0x1]
  %v393 = vlaneseq
  %v394 = vshrl.u32 %v393, 7
  %v395 = vsub.s32 0, %v394
  %v396 = vrot.slane %v391, %v395
  %v398 = vadd.f32 %v369, %v396
  %v399 = vadd.f32 %v372, %v396
  %v400 = vadd.f32 %v375, %v396
  %v401 = vadd.f32 %v378, %v396
  %v402 = vadd.f32 %v381, %v396
  %v403 = vadd.f32 %v384, %v396
  %v404 = vadd.f32 %v387, %v396
  %v405 = vadd.f32 %v390, %v396
  %v406 = vxor.u32 %v398, 2147483648
  %v407 = vxor.u32 %v399, 2147483648
  %v408 = vxor.u32 %v400, 2147483648
  %v409 = vxor.u32 %v401, 2147483648
  %v410 = vxor.u32 %v402, 2147483648
  %v411 = vxor.u32 %v403, 2147483648
  %v412 = vxor.u32 %v404, 2147483648
  %v413 = vxor.u32 %v405, 2147483648
  %v414 = vmul.f32 %v406, 1.442695
  %v415 = vpow.pop %v414
  %v416 = vmul.f32 %v407, 1.442695
  %v417 = vpow.pop %v416
  %v418 = vmul.f32 %v408, 1.442695
  %v419 = vpow.pop %v418
  %v420 = vmul.f32 %v409, 1.442695
  %v421 = vpow.pop %v420
  %v422 = vmul.f32 %v410, 1.442695
  %v423 = vpow.pop %v422
  %v424 = vmul.f32 %v411, 1.442695
  %v425 = vpow.pop %v424
  %v426 = vmul.f32 %v412, 1.442695
  %v427 = vpow.pop %v426
  %v428 = vmul.f32 %v413, 1.442695
  %v429 = vpow.pop %v428
  %v430 = vadd.f32 %v415, 1.0
  %v431 = vadd.f32 %v417, 1.0
  %v432 = vadd.f32 %v419, 1.0
  %v433 = vadd.f32 %v421, 1.0
  %v434 = vadd.f32 %v423, 1.0
  %v435 = vadd.f32 %v425, 1.0
  %v436 = vadd.f32 %v427, 1.0
  %v437 = vadd.f32 %v429, 1.0
  %v438 = vrcp.pop %v430
  %v439 = vmul.f32 1.0, %v438
  %v440 = vrcp.pop %v431
  %v441 = vmul.f32 1.0, %v440
  %v442 = vrcp.pop %v432
  %v443 = vmul.f32 1.0, %v442
  %v444 = vrcp.pop %v433
  %v445 = vmul.f32 1.0, %v444
  %v446 = vrcp.pop %v434
  %v447 = vmul.f32 1.0, %v446
  %v448 = vrcp.pop %v435
  %v449 = vmul.f32 1.0, %v448
  %v450 = vrcp.pop %v436
  %v451 = vmul.f32 1.0, %v450
  %v452 = vrcp.pop %v437
  %v453 = vmul.f32 1.0, %v452
  %vm454 = vcmask 7168
  %455 = vst.msk [vmem:[%s8] sm:$0xff] %vm454, %v439
  %456 = vst.msk [vmem:[%s8 + $0x8] sm:$0xff] %vm454, %v441
  %457 = vst.msk [vmem:[%s8 + $0x10] sm:$0xff] %vm454, %v443
  %458 = vst.msk [vmem:[%s8 + $0x18] sm:$0xff] %vm454, %v445
  %459 = vst.msk [vmem:[%s8 + $0x20] sm:$0xff] %vm454, %v447
  %460 = vst.msk [vmem:[%s8 + $0x28] sm:$0xff] %vm454, %v449
  %461 = vst.msk [vmem:[%s8 + $0x30] sm:$0xff] %vm454, %v451
  %462 = vst.msk [vmem:[%s8 + $0x38] sm:$0xff] %vm454, %v453
  // Predicated region
  $region34: #{link_predictor.1} parent=0 // pred_check
    _
  $region35: #{link_predictor.1} parent=0 // pred_check_branch
    %464 = sbr.rel (0) target = $region37
  $region36: #{link_predictor.1} parent=0 // pred_region
    _
  $region37: #{link_predictor.1} parent=0 // pred_fallthru
    _
  // Predicated region
  $region38: #{link_predictor.1} parent=0 // pred_check
    _
  $region39: #{link_predictor.1} parent=0 // pred_check_branch
    %466 = sbr.rel (0) target = $region41
  $region40: #{link_predictor.1} parent=0 // pred_region
    _
  $region41: #{link_predictor.1} parent=0 // pred_fallthru
    _

</llo_original>
